<compile_context>
chip_gen: v6e
topology: v6e:2x2x1
jax: 0.10.0
libtpu: 0.0.40
codegen_flags: <defaults>
</compile_context>

<pallas_src>
import math
import numpy as np
import jax
import jax.numpy as jnp
from jax.experimental import pallas as pl
from jax.experimental.pallas import tpu as pltpu


def _vmem_limit_bytes():
    """Generation-aware VMEM limit: ~3/4 of physical capacity (96 MiB on
    v5e/v6e's 128 MiB, 48 MiB on v7x's 64 MiB), with a safe fallback."""
    try:
        cap = getattr(pltpu.get_tpu_info(), "vmem_capacity_bytes", None)
        if cap:
            return int(min(cap * 3 // 4, 96 * 1024 * 1024))
    except Exception:
        pass
    return 40 * 1024 * 1024


def _pick_tile(n, candidates):
    for t in candidates:
        if t <= n and n % t == 0:
            return t
    return n


# ---------------------------------------------------------------------------
# Kernel 1: RMSNorm + fused QKV projection (K-tiled accumulation) + RoPE.
#   q/k columns are globally laid out as [all heads' evens | all heads' odds]
#   (permutation + gamma1 folded into wqkv on the host), so rotate-half is two
#   contiguous half-width slices and purely elementwise.
# ---------------------------------------------------------------------------
def _make_norm_qkv_rope_kernel(d_model, eps):
    dh = d_model // 2

    def kernel(x_ref, wqkv_ref, bqkv_ref, cos_ref, sin_ref,
               qe_ref, qo_ref, ke_ref, ko_ref, v_ref,
               acc_ref, ssq_ref):
        k = pl.program_id(2)

        @pl.when(k == 0)
        def _():
            acc_ref[...] = jnp.zeros_like(acc_ref)
            ssq_ref[...] = jnp.zeros_like(ssq_ref)

        x = x_ref[0]                                            # (ts, dk) f32
        # Partial sum of squares for RMSNorm (full-D reduction across k steps).
        ssq_ref[...] += jnp.sum(x * x, axis=-1, keepdims=True)
        # gamma1 is folded into wqkv; the per-row 1/rms scale commutes with the
        # contraction, so the matmul runs on raw x slices (bf16 operands, f32 acc).
        acc_ref[...] += jnp.dot(x.astype(wqkv_ref.dtype), wqkv_ref[...],
                                preferred_element_type=jnp.float32)

        @pl.when(k == pl.num_programs(2) - 1)
        def _():
            r = jax.lax.rsqrt(ssq_ref[...] / d_model + eps)     # (ts, 1) f32
            qkv = acc_ref[...] * r + bqkv_ref[...]
            q = qkv[:, :d_model]
            kk = qkv[:, d_model:2 * d_model]
            v = qkv[:, 2 * d_model:]
            cos = cos_ref[...]                                  # (ts, D/2) f32
            sin = sin_ref[...]
            qa, qb = q[:, :dh], q[:, dh:]
            ka, kb = kk[:, :dh], kk[:, dh:]
            qe_ref[0] = (qa * cos - qb * sin).astype(qe_ref.dtype)
            qo_ref[0] = (qa * sin + qb * cos).astype(qo_ref.dtype)
            ke_ref[0] = (ka * cos - kb * sin).astype(ke_ref.dtype)
            ko_ref[0] = (ka * sin + kb * cos).astype(ko_ref.dtype)
            v_ref[0] = v.astype(v_ref.dtype)

    return kernel


# ---------------------------------------------------------------------------
# Kernel 2: flash-style attention (online softmax over KV tiles) for a group
#           of `heads_per_blk` heads per grid point; lane-dense output written
#           straight into (B, S, D) per-head-contiguous layout.
# ---------------------------------------------------------------------------
def _make_attention_kernel(head_dim, heads_per_blk):
    half = head_dim // 2
    scale = 1.0 / math.sqrt(head_dim)

    def kernel(qe_ref, qo_ref, ke_ref, ko_ref, v_ref, o_ref,
               m_sc, l_sc, acc_sc):
        kv = pl.program_id(3)

        @pl.when(kv == 0)
        def _():
            m_sc[...] = jnp.full_like(m_sc, -jnp.inf)
            l_sc[...] = jnp.zeros_like(l_sc)
            acc_sc[...] = jnp.zeros_like(acc_sc)

        qe = qe_ref[0]                              # (tq, hp*half)
        qo = qo_ref[0]
        ke = ke_ref[0]                              # (tk, hp*half)
        ko = ko_ref[0]
        vv = v_ref[0]                               # (tk, hp*head_dim)

        for h in range(heads_per_blk):              # short, unrolled
            sl = slice(h * half, (h + 1) * half)
            q_h = jnp.concatenate([qe[:, sl], qo[:, sl]], axis=-1)   # (tq, hd)
            k_h = jnp.concatenate([ke[:, sl], ko[:, sl]], axis=-1)   # (tk, hd)
            v_h = vv[:, h * head_dim:(h + 1) * head_dim]             # (tk, hd)
            s = jax.lax.dot_general(q_h, k_h, (((1,), (1,)), ((), ())),
                                    preferred_element_type=jnp.float32) * scale
            m_prev = m_sc[h]                                          # (tq, 1)
            m_new = jnp.maximum(m_prev, jnp.max(s, axis=-1, keepdims=True))
            alpha = jnp.exp(m_prev - m_new)
            p = jnp.exp(s - m_new)                                    # f32
            l_sc[h] = alpha * l_sc[h] + jnp.sum(p, axis=-1, keepdims=True)
            acc_sc[h] = alpha * acc_sc[h] + jnp.dot(
                p.astype(vv.dtype), v_h, preferred_element_type=jnp.float32)
            m_sc[h] = m_new

        @pl.when(kv == pl.num_programs(3) - 1)
        def _():
            # Exact divide (not approx reciprocal): attention rows sum to 1.
            o = jnp.concatenate(
                [acc_sc[h] / l_sc[h] for h in range(heads_per_blk)], axis=-1)
            o_ref[0] = o.astype(o_ref.dtype)

    return kernel


# ---------------------------------------------------------------------------
# Kernel 3: out-proj + residual + ffn_norm + SwiGLU FFN (d_inter-tiled
#           accumulation) + residual.  attn_norm(x) is recomputed from x to
#           avoid the xn HBM round trip.
# ---------------------------------------------------------------------------
def _make_out_ffn_kernel(eps):
    def kernel(x_ref, a_ref, wout_ref, bout_ref, g1_ref, g2_ref,
               w1_ref, b1_ref, w2_ref, b2_ref, w3_ref, b3_ref,
               out_ref, xn2_sc, xc_sc, acc_sc):
        f = pl.program_id(2)
        cdt = wout_ref.dtype

        @pl.when(f == 0)
        def _():
            x = x_ref[0]                                        # (ts, D) f32
            xn = x * jax.lax.rsqrt(
                jnp.mean(x * x, axis=-1, keepdims=True) + eps) * g1_ref[...]
            attn_out = jnp.dot(a_ref[0], wout_ref[...],
                               preferred_element_type=jnp.float32) + bout_ref[...]
            x1 = xn + attn_out              # residual on the *normalized* x
            xn2 = x1 * jax.lax.rsqrt(
                jnp.mean(x1 * x1, axis=-1, keepdims=True) + eps) * g2_ref[...]
            xn2_sc[...] = xn2
            xc_sc[...] = xn2.astype(cdt)
            acc_sc[...] = jnp.zeros_like(acc_sc)

        # One d_inter tile of the SwiGLU FFN, accumulated into acc_sc.
        xc = xc_sc[...]
        gpre = jnp.dot(xc, w2_ref[...],
                       preferred_element_type=jnp.float32) + b2_ref[...]
        gate = gpre / (1.0 + jnp.exp(-gpre))        # exact SiLU (safe at +/-inf)
        h = (jnp.dot(xc, w1_ref[...],
                     preferred_element_type=jnp.float32) + b1_ref[...]) * gate
        acc_sc[...] += jnp.dot(h.astype(cdt), w3_ref[...],
                               preferred_element_type=jnp.float32)

        @pl.when(f == pl.num_programs(2) - 1)
        def _():
            out_ref[0] = xn2_sc[...] + acc_sc[...] + b3_ref[...]

    return kernel


# ---------------------------------------------------------------------------
# Host-side parameter preparation.
# ---------------------------------------------------------------------------
def init_params(key, d_model, n_heads):
    """Random params with the same shapes/init style as the PyTorch module.
    Linear weights are stored (in_features, out_features) so y = x @ W + b."""
    d_inter = int(8 / 3 * d_model)            # matches SwiGLUFFN.__init__
    ks = jax.random.split(key, 5)

    def lin(k, fin, fout):
        kw, kb = jax.random.split(k)
        w = jax.random.normal(kw, (fin, fout), jnp.float32) / np.sqrt(fin)
        b = jax.random.normal(kb, (1, fout), jnp.float32) * 0.01
        return w, b

    wqkv, bqkv = lin(ks[0], d_model, 3 * d_model)
    wout, bout = lin(ks[1], d_model, d_model)
    w1, b1 = lin(ks[2], d_model, d_inter)
    w2, b2 = lin(ks[3], d_model, d_inter)
    w3, b3 = lin(ks[4], d_inter, d_model)
    return dict(
        gamma1=jnp.ones((1, d_model), jnp.float32),   # RMSNorm init = ones
        gamma2=jnp.ones((1, d_model), jnp.float32),
        wqkv=wqkv, bqkv=bqkv, wout=wout, bout=bout,
        w1=w1, b1=b1, w2=w2, b2=b2, w3=w3, b3=b3,
    )


def prepare_params(params, n_heads, head_dim, seq_len,
                   compute_dtype=jnp.bfloat16, base=10000.0):
    """Fold gamma1 and the RoPE even/odd de-interleave into the fused QKV
    weight, precompute (S, D/2) cos/sin maps, zero-pad the SwiGLU intermediate
    dim to a multiple of 256, and cast matmul weights to the compute dtype
    (bf16 by default; accumulation stays f32 in-kernel)."""
    d_model = n_heads * head_dim
    half = head_dim // 2

    # New q/k column order: [all heads' even dims | all heads' odd dims],
    # head-major within each half (head h at columns h*half .. (h+1)*half).
    perm = np.concatenate([
        np.concatenate([h * head_dim + 2 * np.arange(half) for h in range(n_heads)]),
        np.concatenate([h * head_dim + 2 * np.arange(half) + 1 for h in range(n_heads)]),
    ]).astype(np.int64)

    g1 = np.asarray(params["gamma1"], np.float32)
    wqkv = np.asarray(params["wqkv"], np.float32) * g1.reshape(-1, 1)  # fold gamma1
    bqkv = np.asarray(params["bqkv"], np.float32)
    wqkv_p = np.concatenate(
        [wqkv[:, :d_model][:, perm], wqkv[:, d_model:2 * d_model][:, perm],
         wqkv[:, 2 * d_model:]], axis=1)
    bqkv_p = np.concatenate(
        [bqkv[:, :d_model][:, perm], bqkv[:, d_model:2 * d_model][:, perm],
         bqkv[:, 2 * d_model:]], axis=1)

    # cos/sin maps tiled over heads: column h*half + i  <->  frequency i.
    theta = 1.0 / (base ** (np.arange(0, head_dim, 2, dtype=np.float32) / head_dim))
    ang = np.arange(seq_len, dtype=np.float32)[:, None] * theta[None, :]
    cos_map = np.tile(np.cos(ang), (1, n_heads)).astype(np.float32)    # (S, D/2)
    sin_map = np.tile(np.sin(ang), (1, n_heads)).astype(np.float32)

    # Zero-pad the SwiGLU intermediate dim to a multiple of 256 (exact:
    # padded gate lanes are silu(0)=0 and padded w3 rows are 0).
    w1 = np.asarray(params["w1"], np.float32); b1 = np.asarray(params["b1"], np.float32)
    w2 = np.asarray(params["w2"], np.float32); b2 = np.asarray(params["b2"], np.float32)
    w3 = np.asarray(params["w3"], np.float32)
    d_inter = w1.shape[1]
    pad = (-d_inter) % 256
    w1p = np.pad(w1, ((0, 0), (0, pad))); b1p = np.pad(b1, ((0, 0), (0, pad)))
    w2p = np.pad(w2, ((0, 0), (0, pad))); b2p = np.pad(b2, ((0, 0), (0, pad)))
    w3p = np.pad(w3, ((0, pad), (0, 0)))

    cdt = compute_dtype
    return dict(
        gamma1=jnp.asarray(g1),
        gamma2=jnp.asarray(params["gamma2"], jnp.float32),
        wqkv=jnp.asarray(wqkv_p, cdt), bqkv=jnp.asarray(bqkv_p, jnp.float32),
        wout=jnp.asarray(params["wout"], cdt),
        bout=jnp.asarray(params["bout"], jnp.float32),
        w1=jnp.asarray(w1p, cdt), b1=jnp.asarray(b1p, jnp.float32),
        w2=jnp.asarray(w2p, cdt), b2=jnp.asarray(b2p, jnp.float32),
        w3=jnp.asarray(w3p, cdt), b3=jnp.asarray(params["b3"], jnp.float32),
        cos=jnp.asarray(cos_map), sin=jnp.asarray(sin_map),
    )


# ---------------------------------------------------------------------------
# Forward pass wrapper.
# ---------------------------------------------------------------------------
def transformer_block_pallas(x, prep, n_heads, head_dim, eps=1e-5):
    B, S, D = x.shape
    assert D == n_heads * head_dim and head_dim % 2 == 0
    half = head_dim // 2
    dh = D // 2
    cdt = prep["wqkv"].dtype                  # matmul compute dtype
    F = prep["w1"].shape[1]                   # padded d_inter (multiple of 256)
    vmem = _vmem_limit_bytes()

    # Tile sizes (256-aligned where the sizes allow; full extent at toy sizes).
    ts = _pick_tile(S, (512, 256, 128, 64, 32, 16, 8))      # seq tile (k1 / k3)
    dk = _pick_tile(D, (512, 256, 128))                     # QKV contraction tile
    tq = _pick_tile(S, (256, 128, 64, 32, 16, 8))           # q tile (k2)
    tkv = _pick_tile(S, (512, 256, 128, 64, 32, 16, 8))     # kv tile (k2)
    ft = _pick_tile(F, (1024, 512, 256))                    # d_inter tile (k3)
    hp = min(n_heads, max(1, 256 // head_dim))              # heads per k2 block
    while n_heads % hp:
        hp -= 1

    nt, nk = S // ts, D // dk
    nq, nkv, ng = S // tq, S // tkv, n_heads // hp
    nf = F // ft

    # ---- kernel 1: RMSNorm + fused QKV (K-tiled) + RoPE --------------------
    qe, qo, ke, ko, v = pl.pallas_call(
        _make_norm_qkv_rope_kernel(D, eps),
        out_shape=(jax.ShapeDtypeStruct((B, S, dh), cdt),) * 4
                  + (jax.ShapeDtypeStruct((B, S, D), cdt),),
        grid=(B, nt, nk),
        in_specs=[
            pl.BlockSpec((1, ts, dk), lambda b, t, k: (b, t, k)),     # x
            pl.BlockSpec((dk, 3 * D), lambda b, t, k: (k, 0)),        # wqkv tile
            pl.BlockSpec((1, 3 * D), lambda b, t, k: (0, 0)),         # bqkv
            pl.BlockSpec((ts, dh), lambda b, t, k: (t, 0)),           # cos map
            pl.BlockSpec((ts, dh), lambda b, t, k: (t, 0)),           # sin map
        ],
        out_specs=[pl.BlockSpec((1, ts, dh), lambda b, t, k: (b, t, 0))] * 4
                  + [pl.BlockSpec((1, ts, D), lambda b, t, k: (b, t, 0))],
        scratch_shapes=[pltpu.VMEM((ts, 3 * D), jnp.float32),          # qkv acc
                        pltpu.VMEM((ts, 1), jnp.float32)],             # sumsq
        compiler_params=pltpu.CompilerParams(
            dimension_semantics=("parallel", "parallel", "arbitrary"),
            vmem_limit_bytes=vmem),
    )(x, prep["wqkv"], prep["bqkv"], prep["cos"], prep["sin"])

    # ---- kernel 2: flash attention, heads packed per grid point ------------
    attn = pl.pallas_call(
        _make_attention_kernel(head_dim, hp),
        out_shape=jax.ShapeDtypeStruct((B, S, D), cdt),
        grid=(B, nq, ng, nkv),
        in_specs=[
            pl.BlockSpec((1, tq, hp * half), lambda b, qi, g, kv: (b, qi, g)),      # q even
            pl.BlockSpec((1, tq, hp * half), lambda b, qi, g, kv: (b, qi, g)),      # q odd
            pl.BlockSpec((1, tkv, hp * half), lambda b, qi, g, kv: (b, kv, g)),     # k even
            pl.BlockSpec((1, tkv, hp * half), lambda b, qi, g, kv: (b, kv, g)),     # k odd
            pl.BlockSpec((1, tkv, hp * head_dim), lambda b, qi, g, kv: (b, kv, g)), # v
        ],
        out_specs=pl.BlockSpec((1, tq, hp * head_dim),
                               lambda b, qi, g, kv: (b, qi, g)),
        scratch_shapes=[pltpu.VMEM((hp, tq, 1), jnp.float32),          # m
                        pltpu.VMEM((hp, tq, 1), jnp.float32),          # l
                        pltpu.VMEM((hp, tq, head_dim), jnp.float32)],  # acc
        compiler_params=pltpu.CompilerParams(
            dimension_semantics=("parallel", "parallel", "parallel", "arbitrary"),
            vmem_limit_bytes=vmem),
    )(qe, qo, ke, ko, v)

    # ---- kernel 3: out-proj + residual + ffn_norm + SwiGLU (tiled) + residual
    out = pl.pallas_call(
        _make_out_ffn_kernel(eps),
        out_shape=jax.ShapeDtypeStruct((B, S, D), jnp.float32),
        grid=(B, nt, nf),
        in_specs=[
            pl.BlockSpec((1, ts, D), lambda b, t, f: (b, t, 0)),      # x (re-norm)
            pl.BlockSpec((1, ts, D), lambda b, t, f: (b, t, 0)),      # attention out
            pl.BlockSpec((D, D), lambda b, t, f: (0, 0)),             # wout
            pl.BlockSpec((1, D), lambda b, t, f: (0, 0)),             # bout
            pl.BlockSpec((1, D), lambda b, t, f: (0, 0)),             # gamma1
            pl.BlockSpec((1, D), lambda b, t, f: (0, 0)),             # gamma2
            pl.BlockSpec((D, ft), lambda b, t, f: (0, f)),            # w1 tile
            pl.BlockSpec((1, ft), lambda b, t, f: (0, f)),            # b1 tile
            pl.BlockSpec((D, ft), lambda b, t, f: (0, f)),            # w2 tile
            pl.BlockSpec((1, ft), lambda b, t, f: (0, f)),            # b2 tile
            pl.BlockSpec((ft, D), lambda b, t, f: (f, 0)),            # w3 tile
            pl.BlockSpec((1, D), lambda b, t, f: (0, 0)),             # b3
        ],
        out_specs=pl.BlockSpec((1, ts, D), lambda b, t, f: (b, t, 0)),
        scratch_shapes=[pltpu.VMEM((ts, D), jnp.float32),             # xn2 (f32)
                        pltpu.VMEM((ts, D), cdt),                     # xn2 (compute)
                        pltpu.VMEM((ts, D), jnp.float32)],            # ffn acc
        compiler_params=pltpu.CompilerParams(
            dimension_semantics=("parallel", "parallel", "arbitrary"),
            vmem_limit_bytes=vmem),
    )(x, attn, prep["wout"], prep["bout"], prep["gamma1"], prep["gamma2"],
      prep["w1"], prep["b1"], prep["w2"], prep["b2"], prep["w3"], prep["b3"])

    return out


# ---------------------------------------------------------------------------
# Pure-JAX reference (mirrors the PyTorch module exactly, f32 throughout).
# ---------------------------------------------------------------------------
def reference_block(x, params, n_heads, head_dim, eps=1e-5, base=10000.0):
    B, S, D = x.shape
    p = params

    def rmsnorm(t, g):
        rms = jnp.sqrt(jnp.mean(t * t, axis=-1, keepdims=True) + eps)
        return t / rms * g

    xn = rmsnorm(x, p["gamma1"])
    qkv = xn @ p["wqkv"] + p["bqkv"]
    q, k, v = jnp.split(qkv, 3, axis=-1)

    def to_heads(t):
        return t.reshape(B, S, n_heads, head_dim).transpose(0, 2, 1, 3)

    q, k, v = to_heads(q), to_heads(k), to_heads(v)

    theta = 1.0 / (base ** (jnp.arange(0, head_dim, 2, dtype=jnp.float32) / head_dim))

    def rope(t):
        pos = jnp.arange(S, dtype=jnp.float32)[:, None]
        ang = pos * theta[None, :]
        cos = jnp.cos(ang)[None, None]
        sin = jnp.sin(ang)[None, None]
        x1, x2 = t[..., ::2], t[..., 1::2]
        return jnp.concatenate([-x2 * sin + x1 * cos, x1 * sin + x2 * cos], axis=-1)

    q, k = rope(q), rope(k)
    scores = jnp.einsum("bhqd,bhkd->bhqk", q, k) / math.sqrt(head_dim)
    attn = jax.nn.softmax(scores, axis=-1)
    o = jnp.einsum("bhqk,bhkd->bhqd", attn, v)
    o = o.transpose(0, 2, 1, 3).reshape(B, S, D)
    attn_out = o @ p["wout"] + p["bout"]
    x1r = xn + attn_out
    xn2 = rmsnorm(x1r, p["gamma2"])
    gate = jax.nn.silu(xn2 @ p["w2"] + p["b2"])
    hh = (xn2 @ p["w1"] + p["b1"]) * gate
    ffn_out = hh @ p["w3"] + p["b3"]
    return xn2 + ffn_out


if __name__ == "__main__":
    B, S, D, H = 2, 16, 32, 4
    head_dim = D // H

    key = jax.random.PRNGKey(0)
    kx, kp = jax.random.split(key)
    params = init_params(kp, D, H)
    x = jax.random.normal(kx, (B, S, D), jnp.float32)

    with jax.default_matmul_precision("highest"):
        ref = reference_block(x, params, H, head_dim)
    ref = jax.block_until_ready(ref)

    # (a) structural validation: f32 compute path.  With exact softmax/SiLU
    #     divides the tolerance is >10x tighter than the previous version.
    prep_f32 = prepare_params(params, H, head_dim, S, compute_dtype=jnp.float32)
    out_f32 = jax.block_until_ready(transformer_block_pallas(x, prep_f32, H, head_dim))
    assert out_f32.shape == (B, S, D)
    err_f32 = jnp.abs(out_f32 - ref)
    assert float(jnp.max(err_f32)) < 5e-3, f"f32 path max abs err {float(jnp.max(err_f32))}"
    assert float(jnp.mean(err_f32)) < 1e-3, f"f32 path mean abs err {float(jnp.mean(err_f32))}"

    # (b) performance path: bf16 matmul operands with f32 accumulation.
    prep_bf16 = prepare_params(params, H, head_dim, S, compute_dtype=jnp.bfloat16)
    out_bf16 = jax.block_until_ready(transformer_block_pallas(x, prep_bf16, H, head_dim))
    assert out_bf16.shape == (B, S, D)
    err_bf16 = jnp.abs(out_bf16 - ref)
    assert float(jnp.max(err_bf16)) < 2e-1, f"bf16 path max abs err {float(jnp.max(err_bf16))}"
    assert float(jnp.mean(err_bf16)) < 3e-2, f"bf16 path mean abs err {float(jnp.mean(err_bf16))}"

    print("KERNEL_OK")
</pallas_src>

<mosaic_0001>
module attributes {stable_mosaic.version = 11 : i64} {
  func.func @kernel(%arg0: i32, %arg1: i32, %arg2: i32, %arg3: memref<1x16x32xf32, #tpu.memory_space<vmem>>, %arg4: memref<32x96xf32, #tpu.memory_space<vmem>>, %arg5: memref<1x96xf32, #tpu.memory_space<vmem>>, %arg6: memref<16x16xf32, #tpu.memory_space<vmem>>, %arg7: memref<16x16xf32, #tpu.memory_space<vmem>>, %arg8: memref<1x16x16xf32, #tpu.memory_space<vmem>>, %arg9: memref<1x16x16xf32, #tpu.memory_space<vmem>>, %arg10: memref<1x16x16xf32, #tpu.memory_space<vmem>>, %arg11: memref<1x16x16xf32, #tpu.memory_space<vmem>>, %arg12: memref<1x16x32xf32, #tpu.memory_space<vmem>>, %arg13: memref<16x96xf32, #tpu.memory_space<vmem>>, %arg14: memref<16x1xf32, #tpu.memory_space<vmem>>) attributes {dimension_semantics = [#tpu.dimension_semantics<parallel>, #tpu.dimension_semantics<parallel>, #tpu.dimension_semantics<arbitrary>], iteration_bounds = array<i64: 2, 1, 1>, scalar_prefetch = 0 : i64, scratch_operands = 2 : i64, tpu.core_type = #tpu.core_type<tc>, window_params = [{transform_indices = @transform_0, window_bounds = array<i64: 1, 16, 32>}, {transform_indices = @transform_1, window_bounds = array<i64: 32, 96>}, {pipeline_mode = #tpu.pipeline_mode<synchronous>, transform_indices = @transform_2, window_bounds = array<i64: 1, 96>}, {transform_indices = @transform_3, window_bounds = array<i64: 16, 16>}, {transform_indices = @transform_4, window_bounds = array<i64: 16, 16>}, {transform_indices = @transform_5, window_bounds = array<i64: 1, 16, 16>}, {transform_indices = @transform_6, window_bounds = array<i64: 1, 16, 16>}, {transform_indices = @transform_7, window_bounds = array<i64: 1, 16, 16>}, {transform_indices = @transform_8, window_bounds = array<i64: 1, 16, 16>}, {transform_indices = @transform_9, window_bounds = array<i64: 1, 16, 32>}]} {
    %c0_i32 = arith.constant 0 : i32
    %0 = arith.cmpi eq, %arg2, %c0_i32 : i32
    %1 = arith.extui %0 : i1 to i32
    %c0_i32_0 = arith.constant 0 : i32
    %2 = arith.cmpi ne, %1, %c0_i32_0 : i32
    scf.if %2 {
      %cst_16 = arith.constant 0.000000e+00 : f32
      %19 = vector.broadcast %cst_16 : f32 to vector<16x96xf32>
      %c0_17 = arith.constant 0 : index
      %c0_18 = arith.constant 0 : index
      %20 = vector.load %arg13[%c0_17, %c0_18] : memref<16x96xf32, #tpu.memory_space<vmem>>, vector<16x96xf32>
      tpu.vector_store %arg13[%c0_17, %c0_18], %19 {strides = array<i32>} : memref<16x96xf32, #tpu.memory_space<vmem>>, vector<16x96xf32>,
      %cst_19 = arith.constant 0.000000e+00 : f32
      %21 = vector.broadcast %cst_19 : f32 to vector<16x1xf32>
      %c0_20 = arith.constant 0 : index
      %c0_21 = arith.constant 0 : index
      %22 = vector.load %arg14[%c0_20, %c0_21] : memref<16x1xf32, #tpu.memory_space<vmem>>, vector<16x1xf32>
      tpu.vector_store %arg14[%c0_20, %c0_21], %21 {strides = array<i32>} : memref<16x1xf32, #tpu.memory_space<vmem>>, vector<16x1xf32>,
    } else {
    }
    %c0 = arith.constant 0 : index
    %c0_1 = arith.constant 0 : index
    %c0_2 = arith.constant 0 : index
    %3 = vector.load %arg3[%c0, %c0_1, %c0_2] : memref<1x16x32xf32, #tpu.memory_space<vmem>>, vector<1x16x32xf32>
    %4 = vector.shape_cast %3 : vector<1x16x32xf32> to vector<16x32xf32>
    %c0_3 = arith.constant 0 : index
    %c0_4 = arith.constant 0 : index
    %5 = vector.load %arg14[%c0_3, %c0_4] : memref<16x1xf32, #tpu.memory_space<vmem>>, vector<16x1xf32>
    %6 = arith.mulf %4, %4 : vector<16x32xf32>
    %cst = arith.constant dense<0.000000e+00> : vector<16xf32>
    %7 = vector.multi_reduction <add>, %6, %cst [1] : vector<16x32xf32> to vector<16xf32>
    %8 = vector.shape_cast %7 : vector<16xf32> to vector<16x1xf32>
    %9 = arith.addf %5, %8 : vector<16x1xf32>
    %c0_5 = arith.constant 0 : index
    %c0_6 = arith.constant 0 : index
    %10 = vector.load %arg14[%c0_5, %c0_6] : memref<16x1xf32, #tpu.memory_space<vmem>>, vector<16x1xf32>
    tpu.vector_store %arg14[%c0_5, %c0_6], %9 {strides = array<i32>} : memref<16x1xf32, #tpu.memory_space<vmem>>, vector<16x1xf32>,
    %c0_7 = arith.constant 0 : index
    %c0_8 = arith.constant 0 : index
    %11 = vector.load %arg13[%c0_7, %c0_8] : memref<16x96xf32, #tpu.memory_space<vmem>>, vector<16x96xf32>
    %c0_9 = arith.constant 0 : index
    %c0_10 = arith.constant 0 : index
    %12 = vector.load %arg4[%c0_9, %c0_10] : memref<32x96xf32, #tpu.memory_space<vmem>>, vector<32x96xf32>
    %cst_11 = arith.constant dense<0.000000e+00> : vector<16x96xf32>
    %13 = tpu.matmul %4, %12, %cst_11 {dimension_numbers = #tpu.dot_dimension_numbers<[1], [0], [0], [1], [0, 0, 1, 1], [], []>} : vector<16x32xf32>, vector<32x96xf32>, vector<16x96xf32> -> vector<16x96xf32>
    %14 = arith.addf %11, %13 : vector<16x96xf32>
    %c0_12 = arith.constant 0 : index
    %c0_13 = arith.constant 0 : index
    %15 = vector.load %arg13[%c0_12, %c0_13] : memref<16x96xf32, #tpu.memory_space<vmem>>, vector<16x96xf32>
    tpu.vector_store %arg13[%c0_12, %c0_13], %14 {strides = array<i32>} : memref<16x96xf32, #tpu.memory_space<vmem>>, vector<16x96xf32>,
    %c0_i32_14 = arith.constant 0 : i32
    %16 = arith.cmpi eq, %arg2, %c0_i32_14 : i32
    %17 = arith.extui %16 : i1 to i32
    %c0_i32_15 = arith.constant 0 : i32
    %18 = arith.cmpi ne, %17, %c0_i32_15 : i32
    scf.if %18 {
      %c0_16 = arith.constant 0 : index
      %c0_17 = arith.constant 0 : index
      %19 = vector.load %arg14[%c0_16, %c0_17] : memref<16x1xf32, #tpu.memory_space<vmem>>, vector<16x1xf32>
      %cst_18 = arith.constant 3.200000e+01 : f32
      %20 = vector.broadcast %cst_18 : f32 to vector<16x1xf32>
      %21 = arith.divf %19, %20 : vector<16x1xf32>
      %cst_19 = arith.constant 9.99999974E-6 : f32
      %22 = vector.broadcast %cst_19 : f32 to vector<16x1xf32>
      %23 = arith.addf %21, %22 : vector<16x1xf32>
      %24 = math.rsqrt %23 : vector<16x1xf32>
      %c0_20 = arith.constant 0 : index
      %c0_21 = arith.constant 0 : index
      %25 = vector.load %arg13[%c0_20, %c0_21] : memref<16x96xf32, #tpu.memory_space<vmem>>, vector<16x96xf32>
      %26 = vector.broadcast %24 : vector<16x1xf32> to vector<16x96xf32>
      %27 = arith.mulf %25, %26 : vector<16x96xf32>
      %c0_22 = arith.constant 0 : index
      %c0_23 = arith.constant 0 : index
      %28 = vector.load %arg5[%c0_22, %c0_23] : memref<1x96xf32, #tpu.memory_space<vmem>>, vector<1x96xf32>
      %29 = vector.broadcast %28 : vector<1x96xf32> to vector<16x96xf32>
      %30 = arith.addf %27, %29 : vector<16x96xf32>
      %31 = vector.extract_strided_slice %30 {offsets = [0, 0], sizes = [16, 32], strides = [1, 1]} : vector<16x96xf32> to vector<16x32xf32>
      %32 = vector.extract_strided_slice %30 {offsets = [0, 32], sizes = [16, 32], strides = [1, 1]} : vector<16x96xf32> to vector<16x32xf32>
      %33 = vector.extract_strided_slice %30 {offsets = [0, 64], sizes = [16, 32], strides = [1, 1]} : vector<16x96xf32> to vector<16x32xf32>
      %c0_24 = arith.constant 0 : index
      %c0_25 = arith.constant 0 : index
      %34 = vector.load %arg6[%c0_24, %c0_25] : memref<16x16xf32, #tpu.memory_space<vmem>>, vector<16x16xf32>
      %c0_26 = arith.constant 0 : index
      %c0_27 = arith.constant 0 : index
      %35 = vector.load %arg7[%c0_26, %c0_27] : memref<16x16xf32, #tpu.memory_space<vmem>>, vector<16x16xf32>
      %36 = vector.extract_strided_slice %31 {offsets = [0, 0], sizes = [16, 16], strides = [1, 1]} : vector<16x32xf32> to vector<16x16xf32>
      %37 = vector.extract_strided_slice %31 {offsets = [0, 16], sizes = [16, 16], strides = [1, 1]} : vector<16x32xf32> to vector<16x16xf32>
      %38 = vector.extract_strided_slice %32 {offsets = [0, 0], sizes = [16, 16], strides = [1, 1]} : vector<16x32xf32> to vector<16x16xf32>
      %39 = vector.extract_strided_slice %32 {offsets = [0, 16], sizes = [16, 16], strides = [1, 1]} : vector<16x32xf32> to vector<16x16xf32>
      %40 = arith.mulf %36, %34 : vector<16x16xf32>
      %41 = arith.mulf %37, %35 : vector<16x16xf32>
      %42 = arith.subf %40, %41 : vector<16x16xf32>
      %c0_28 = arith.constant 0 : index
      %c0_29 = arith.constant 0 : index
      %c0_30 = arith.constant 0 : index
      %43 = vector.load %arg8[%c0_28, %c0_29, %c0_30] : memref<1x16x16xf32, #tpu.memory_space<vmem>>, vector<1x16x16xf32>
      %44 = vector.shape_cast %43 : vector<1x16x16xf32> to vector<16x16xf32>
      %45 = vector.shape_cast %42 : vector<16x16xf32> to vector<1x16x16xf32>
      tpu.vector_store %arg8[%c0_28, %c0_29, %c0_30], %45 {strides = array<i32>} : memref<1x16x16xf32, #tpu.memory_space<vmem>>, vector<1x16x16xf32>,
      %46 = arith.mulf %36, %35 : vector<16x16xf32>
      %47 = arith.mulf %37, %34 : vector<16x16xf32>
      %48 = arith.addf %46, %47 : vector<16x16xf32>
      %c0_31 = arith.constant 0 : index
      %c0_32 = arith.constant 0 : index
      %c0_33 = arith.constant 0 : index
      %49 = vector.load %arg9[%c0_31, %c0_32, %c0_33] : memref<1x16x16xf32, #tpu.memory_space<vmem>>, vector<1x16x16xf32>
      %50 = vector.shape_cast %49 : vector<1x16x16xf32> to vector<16x16xf32>
      %51 = vector.shape_cast %48 : vector<16x16xf32> to vector<1x16x16xf32>
      tpu.vector_store %arg9[%c0_31, %c0_32, %c0_33], %51 {strides = array<i32>} : memref<1x16x16xf32, #tpu.memory_space<vmem>>, vector<1x16x16xf32>,
      %52 = arith.mulf %38, %34 : vector<16x16xf32>
      %53 = arith.mulf %39, %35 : vector<16x16xf32>
      %54 = arith.subf %52, %53 : vector<16x16xf32>
      %c0_34 = arith.constant 0 : index
      %c0_35 = arith.constant 0 : index
      %c0_36 = arith.constant 0 : index
      %55 = vector.load %arg10[%c0_34, %c0_35, %c0_36] : memref<1x16x16xf32, #tpu.memory_space<vmem>>, vector<1x16x16xf32>
      %56 = vector.shape_cast %55 : vector<1x16x16xf32> to vector<16x16xf32>
      %57 = vector.shape_cast %54 : vector<16x16xf32> to vector<1x16x16xf32>
      tpu.vector_store %arg10[%c0_34, %c0_35, %c0_36], %57 {strides = array<i32>} : memref<1x16x16xf32, #tpu.memory_space<vmem>>, vector<1x16x16xf32>,
      %58 = arith.mulf %38, %35 : vector<16x16xf32>
      %59 = arith.mulf %39, %34 : vector<16x16xf32>
      %60 = arith.addf %58, %59 : vector<16x16xf32>
      %c0_37 = arith.constant 0 : index
      %c0_38 = arith.constant 0 : index
      %c0_39 = arith.constant 0 : index
      %61 = vector.load %arg11[%c0_37, %c0_38, %c0_39] : memref<1x16x16xf32, #tpu.memory_space<vmem>>, vector<1x16x16xf32>
      %62 = vector.shape_cast %61 : vector<1x16x16xf32> to vector<16x16xf32>
      %63 = vector.shape_cast %60 : vector<16x16xf32> to vector<1x16x16xf32>
      tpu.vector_store %arg11[%c0_37, %c0_38, %c0_39], %63 {strides = array<i32>} : memref<1x16x16xf32, #tpu.memory_space<vmem>>, vector<1x16x16xf32>,
      %c0_40 = arith.constant 0 : index
      %c0_41 = arith.constant 0 : index
      %c0_42 = arith.constant 0 : index
      %64 = vector.load %arg12[%c0_40, %c0_41, %c0_42] : memref<1x16x32xf32, #tpu.memory_space<vmem>>, vector<1x16x32xf32>
      %65 = vector.shape_cast %64 : vector<1x16x32xf32> to vector<16x32xf32>
      %66 = vector.shape_cast %33 : vector<16x32xf32> to vector<1x16x32xf32>
      tpu.vector_store %arg12[%c0_40, %c0_41, %c0_42], %66 {strides = array<i32>} : memref<1x16x32xf32, #tpu.memory_space<vmem>>, vector<1x16x32xf32>,
    } else {
    }
    return
  }
  func.func @transform_0(%arg0: i32, %arg1: i32, %arg2: i32) -> (i32, i32, i32) {
    %c0_i32 = arith.constant 0 : i32
    return %arg0, %arg1, %arg2 : i32, i32, i32
  }
  func.func @transform_1(%arg0: i32, %arg1: i32, %arg2: i32) -> (i32, i32) {
    %c0_i32 = arith.constant 0 : i32
    %c0_i32_0 = arith.constant 0 : i32
    return %arg2, %c0_i32 : i32, i32
  }
  func.func @transform_2(%arg0: i32, %arg1: i32, %arg2: i32) -> (i32, i32) {
    %c0_i32 = arith.constant 0 : i32
    %c0_i32_0 = arith.constant 0 : i32
    %c0_i32_1 = arith.constant 0 : i32
    return %c0_i32, %c0_i32_0 : i32, i32
  }
  func.func @transform_3(%arg0: i32, %arg1: i32, %arg2: i32) -> (i32, i32) {
    %c0_i32 = arith.constant 0 : i32
    %c0_i32_0 = arith.constant 0 : i32
    return %arg1, %c0_i32 : i32, i32
  }
  func.func @transform_4(%arg0: i32, %arg1: i32, %arg2: i32) -> (i32, i32) {
    %c0_i32 = arith.constant 0 : i32
    %c0_i32_0 = arith.constant 0 : i32
    return %arg1, %c0_i32 : i32, i32
  }
  func.func @transform_5(%arg0: i32, %arg1: i32, %arg2: i32) -> (i32, i32, i32) {
    %c0_i32 = arith.constant 0 : i32
    %c0_i32_0 = arith.constant 0 : i32
    return %arg0, %arg1, %c0_i32 : i32, i32, i32
  }
  func.func @transform_6(%arg0: i32, %arg1: i32, %arg2: i32) -> (i32, i32, i32) {
    %c0_i32 = arith.constant 0 : i32
    %c0_i32_0 = arith.constant 0 : i32
    return %arg0, %arg1, %c0_i32 : i32, i32, i32
  }
  func.func @transform_7(%arg0: i32, %arg1: i32, %arg2: i32) -> (i32, i32, i32) {
    %c0_i32 = arith.constant 0 : i32
    %c0_i32_0 = arith.constant 0 : i32
    return %arg0, %arg1, %c0_i32 : i32, i32, i32
  }
  func.func @transform_8(%arg0: i32, %arg1: i32, %arg2: i32) -> (i32, i32, i32) {
    %c0_i32 = arith.constant 0 : i32
    %c0_i32_0 = arith.constant 0 : i32
    return %arg0, %arg1, %c0_i32 : i32, i32, i32
  }
  func.func @transform_9(%arg0: i32, %arg1: i32, %arg2: i32) -> (i32, i32, i32) {
    %c0_i32 = arith.constant 0 : i32
    %c0_i32_0 = arith.constant 0 : i32
    return %arg0, %arg1, %c0_i32 : i32, i32, i32
  }
}

</mosaic_0001>

<llo_original>
// kernel: tpu_custom_call.1
$region0: #{tpu_custom_call.1}
  #allocation0 [shape = 'u32[]', space=smem, size = 0x4, offset = 0x4, fixed_abs, tag = 'smem constant byte address 0x4 - core index']
  #allocation1 [shape = 'u32[144,128]{1,0:T(1,128)}', space=vmem, size = 0x12000, scoped, tag = 'internal scratch']
  #allocation2 [shape = 'f32[16,96]{1,0:T(8,128)}', space=vmem, size = 0x2000, scoped, tag = 'scratch operand']
  #allocation3 [shape = 'f32[16,1]{1,0:T(8,128)}', space=vmem, size = 0x2000, scoped, tag = 'scratch operand']
  %s0 = inlined_call_operand.hbm [shape: f32[2,16,32], index: 0, kind: input, shape index: {}]
  %s1 = inlined_call_operand.hbm [shape: f32[32,96], index: 1, kind: input, shape index: {}]
  %s2 = inlined_call_operand.vmem [shape: f32[1,96], index: 2, kind: input, shape index: {}]
  %s3 = inlined_call_operand.hbm [shape: f32[16,16], index: 3, kind: input, shape index: {}]
  %s4 = inlined_call_operand.hbm [shape: f32[16,16], index: 4, kind: input, shape index: {}]
  %s5 = inlined_call_operand.hbm [shape: f32[2,16,16], index: 5, kind: output, shape index: {0}]
  %s6 = inlined_call_operand.hbm [shape: f32[2,16,16], index: 6, kind: output, shape index: {1}]
  %s7 = inlined_call_operand.hbm [shape: f32[2,16,16], index: 7, kind: output, shape index: {2}]
  %s8 = inlined_call_operand.hbm [shape: f32[2,16,16], index: 8, kind: output, shape index: {3}]
  %s9 = inlined_call_operand.hbm [shape: f32[2,16,32], index: 9, kind: output, shape index: {4}]
  %10 = xla_tuple %s5, %s6, %s7, %s8, %s9
  %s11 = sld [smem:[#allocation0]]
  $region109: #{tpu_custom_call.1} parent=0
    _
  %s13 = ssub.s32 1, %s11
  %s14 = scalar_select 0, %s13, %s11
  $region1: #{tpu_custom_call.1} parent=0
    #allocation4 [shape = 'u8[16384]{0}', space=vmem, size = 0x4000, scoped, tag = 'input window, operand 0']
    #allocation5 [shape = 's32[2]{0}', space=sflag, size = 0x8, scoped, tag = 'scoped memory for tpu_custom_call.1']
    #allocation6 [shape = 's32[2]{0}', space=sflag, size = 0x8, scoped, tag = 'scoped memory for tpu_custom_call.1']
    #allocation7 [shape = 'u8[16384]{0}', space=vmem, size = 0x4000, scoped, tag = 'input window, operand 1, single buffered']
    #allocation8 [shape = 's32[1]{0}', space=sflag, size = 0x4, scoped, tag = 'scoped memory for tpu_custom_call.1']
    #allocation9 [shape = 'u8[8192]{0}', space=vmem, size = 0x2000, scoped, tag = 'input window, operand 3, single buffered']
    #allocation10 [shape = 'u8[8192]{0}', space=vmem, size = 0x2000, scoped, tag = 'input window, operand 4, single buffered']
    #allocation11 [shape = 's32[1]{0}', space=sflag, size = 0x4, scoped, tag = 'scoped memory for tpu_custom_call.1']
    #allocation12 [shape = 'u8[16384]{0}', space=vmem, size = 0x4000, scoped, tag = 'output window, operand 0']
    #allocation13 [shape = 'u8[16384]{0}', space=vmem, size = 0x4000, scoped, tag = 'output window, operand 1']
    #allocation14 [shape = 's32[2]{0}', space=sflag, size = 0x8, scoped, tag = 'scoped memory for tpu_custom_call.1']
    #allocation15 [shape = 'u8[16384]{0}', space=vmem, size = 0x4000, scoped, tag = 'output window, operand 2']
    #allocation16 [shape = 'u8[16384]{0}', space=vmem, size = 0x4000, scoped, tag = 'output window, operand 3']
    #allocation17 [shape = 's32[2]{0}', space=sflag, size = 0x8, scoped, tag = 'scoped memory for tpu_custom_call.1']
    #allocation18 [shape = 'u8[16384]{0}', space=vmem, size = 0x4000, scoped, tag = 'output window, operand 4']
    %15 = vsyncpa [#allocation5], 0
    %s16 = scalar_lea.sflag [#allocation5], 1
    %17 = vsyncpa %s16, 0
    %18 = vsyncpa [#allocation8], 0
    %19 = vsyncpa [#allocation11], 0
    %20 = vsyncpa [#allocation6], 0
    %s21 = scalar_lea.sflag [#allocation6], 1
    %22 = vsyncpa %s21, 0
    %23 = vsyncpa [#allocation14], 0
    %s24 = scalar_lea.sflag [#allocation14], 1
    %25 = vsyncpa %s24, 0
    %26 = vsyncpa [#allocation17], 0
    %s27 = scalar_lea.sflag [#allocation17], 1
    %28 = vsyncpa %s27, 0
    loop: start=0, step=1, limit=4
    $region2: #{tpu_custom_call.1} parent=1 // loop_pre_header
      _
    $region3: #{tpu_custom_call.1} parent=1 // loop_header
      %s30 = sphi 0, %s34
      %p31 = scmp.ge.s32.totalorder %s30, 4
      %s37 = sphi 0, %s56
      %s38 = sphi 0, %s52
      %s39 = sphi 0, %s48
      %s40 = sphi 0, %s37
      %s41 = sphi 0, %s38
      %s42 = sphi 0, %s39
      %s43 = sphi 0, %s40
      %s44 = sphi 0, %s41
      %s45 = sphi 0, %s42
      %s63 = sphi 0, %s65
      %s66 = sphi 0, %s63
      %s67 = sphi 0, %s66
      %s83 = sphi 0, %s67
      %s89 = sphi 0, %s91
      %s92 = sphi 0, %s89
      %s93 = sphi 0, %s92
      %s109 = sphi 0, %s93
      %s113 = sphi 0, %s113
      %s115 = sphi 0, %s113
      %s116 = sphi 0, %s115
      %s130 = sphi 0, %s116
      %s136 = sphi 0, %s138
      %s139 = sphi 0, %s136
      %s140 = sphi 0, %s139
      %s156 = sphi 0, %s140
      %s162 = sphi 0, %s164
      %s165 = sphi 0, %s162
      %s166 = sphi 0, %s165
      %s182 = sphi 0, %s166
      %s190 = sphi 0, %s192
      %s193 = sphi 0, %s190
      %s194 = sphi 0, %s193
      %s210 = sphi 0, %s194
      %s218 = sphi 0, %s220
      %s221 = sphi 0, %s218
      %s222 = sphi 0, %s221
      %s238 = sphi 0, %s222
      %s246 = sphi 0, %s248
      %s249 = sphi 0, %s246
      %s250 = sphi 0, %s249
      %s266 = sphi 0, %s250
      %s274 = sphi 0, %s276
      %s277 = sphi 0, %s274
      %s278 = sphi 0, %s277
      %s294 = sphi 0, %s278
      %s302 = sphi 0, %s304
      %s305 = sphi 0, %s302
      %s306 = sphi 0, %s305
      %s322 = sphi 0, %s306
    $region4: #{tpu_custom_call.1} parent=1 // loop_header_branch
      %33 = sbr.rel (%p31) target = $region8
    $region5: #{tpu_custom_call.1} parent=1 // loop_body
      %s35 = ssub.s32 %s30, 1
      %s36 = ssub.s32 %s30, 2
      %s46 = sadd.s32 1, %s39
      %p47 = scmp.ge.s32.totalorder %s46, 1
      %s48 = scalar_select %p47, 0, %s46
      %s49 = sadd.s32 1, %s38
      %s50 = scalar_select %p47, %s49, %s38
      %p51 = scmp.ge.s32.totalorder %s50, 1
      %s52 = scalar_select %p51, 0, %s50
      %s53 = sadd.s32 1, %s37
      %s54 = scalar_select %p51, %s53, %s37
      %p55 = scmp.ge.s32.totalorder %s54, 2
      %s56 = scalar_select %p55, 0, %s54
      %s57 = ssub.s32 %s37, %s56
      %s58 = ssub.s32 %s38, %s52
      %s59 = sor.u32 %s57, %s58
      %s60 = ssub.s32 %s39, %s48
      %s61 = sor.u32 %s59, %s60
      %p62 = scmp.eq.s32.totalorder %s61, 0
      %s64 = sadd.s32 %s63, 1
      %s65 = scalar_select %p62, %s63, %s64
      %p68 = pneg %p62
      %p69 = scmp.eq.s32.totalorder %s30, 1
      %p70 = por %p68, %p69
      %p71 = scmp.ne.s32.totalorder %s63, %s66
      %p72 = scmp.eq.s32.totalorder %s30, 0
      %p73 = por %p71, %p72
      %p74 = scmp.ne.s32.totalorder %s63, %s66
      %p75 = scmp.eq.s32.totalorder %s35, 1
      %p76 = por %p74, %p75
      %p77 = scmp.ne.s32.totalorder %s66, %s67
      %p78 = scmp.eq.s32.totalorder %s35, 0
      %p79 = por %p77, %p78
      %p80 = scmp.ne.s32.totalorder %s66, %s67
      %p81 = scmp.eq.s32.totalorder %s36, 1
      %p82 = por %p80, %p81
      %p84 = scmp.ne.s32.totalorder %s67, %s83
      %p85 = scmp.eq.s32.totalorder %s36, 0
      %p86 = por %p84, %p85
      %s87 = ssub.s32 %s39, %s48
      %p88 = scmp.eq.s32.totalorder %s87, 0
      %s90 = sadd.s32 %s89, 1
      %s91 = scalar_select %p88, %s89, %s90
      %p94 = pneg %p88
      %p95 = scmp.eq.s32.totalorder %s30, 1
      %p96 = por %p94, %p95
      %p97 = scmp.ne.s32.totalorder %s89, %s92
      %p98 = scmp.eq.s32.totalorder %s30, 0
      %p99 = por %p97, %p98
      %p100 = scmp.ne.s32.totalorder %s89, %s92
      %p101 = scmp.eq.s32.totalorder %s35, 1
      %p102 = por %p100, %p101
      %p103 = scmp.ne.s32.totalorder %s92, %s93
      %p104 = scmp.eq.s32.totalorder %s35, 0
      %p105 = por %p103, %p104
      %p106 = scmp.ne.s32.totalorder %s92, %s93
      %p107 = scmp.eq.s32.totalorder %s36, 1
      %p108 = por %p106, %p107
      %p110 = scmp.ne.s32.totalorder %s93, %s109
      %p111 = scmp.eq.s32.totalorder %s36, 0
      %p112 = por %p110, %p111
      %s114 = sadd.s32 %s113, 1
      %p117 = scmp.eq.s32.totalorder %s30, 1
      %p118 = scmp.ne.s32.totalorder %s113, %s115
      %p119 = scmp.eq.s32.totalorder %s30, 0
      %p120 = por %p118, %p119
      %p121 = scmp.ne.s32.totalorder %s113, %s115
      %p122 = scmp.eq.s32.totalorder %s35, 1
      %p123 = por %p121, %p122
      %p124 = scmp.ne.s32.totalorder %s115, %s116
      %p125 = scmp.eq.s32.totalorder %s35, 0
      %p126 = por %p124, %p125
      %p127 = scmp.ne.s32.totalorder %s115, %s116
      %p128 = scmp.eq.s32.totalorder %s36, 1
      %p129 = por %p127, %p128
      %p131 = scmp.ne.s32.totalorder %s116, %s130
      %p132 = scmp.eq.s32.totalorder %s36, 0
      %p133 = por %p131, %p132
      %s134 = ssub.s32 %s38, %s52
      %p135 = scmp.eq.s32.totalorder %s134, 0
      %s137 = sadd.s32 %s136, 1
      %s138 = scalar_select %p135, %s136, %s137
      %p141 = pneg %p135
      %p142 = scmp.eq.s32.totalorder %s30, 1
      %p143 = por %p141, %p142
      %p144 = scmp.ne.s32.totalorder %s136, %s139
      %p145 = scmp.eq.s32.totalorder %s30, 0
      %p146 = por %p144, %p145
      %p147 = scmp.ne.s32.totalorder %s136, %s139
      %p148 = scmp.eq.s32.totalorder %s35, 1
      %p149 = por %p147, %p148
      %p150 = scmp.ne.s32.totalorder %s139, %s140
      %p151 = scmp.eq.s32.totalorder %s35, 0
      %p152 = por %p150, %p151
      %p153 = scmp.ne.s32.totalorder %s139, %s140
      %p154 = scmp.eq.s32.totalorder %s36, 1
      %p155 = por %p153, %p154
      %p157 = scmp.ne.s32.totalorder %s140, %s156
      %p158 = scmp.eq.s32.totalorder %s36, 0
      %p159 = por %p157, %p158
      %s160 = ssub.s32 %s38, %s52
      %p161 = scmp.eq.s32.totalorder %s160, 0
      %s163 = sadd.s32 %s162, 1
      %s164 = scalar_select %p161, %s162, %s163
      %p167 = pneg %p161
      %p168 = scmp.eq.s32.totalorder %s30, 1
      %p169 = por %p167, %p168
      %p170 = scmp.ne.s32.totalorder %s162, %s165
      %p171 = scmp.eq.s32.totalorder %s30, 0
      %p172 = por %p170, %p171
      %p173 = scmp.ne.s32.totalorder %s162, %s165
      %p174 = scmp.eq.s32.totalorder %s35, 1
      %p175 = por %p173, %p174
      %p176 = scmp.ne.s32.totalorder %s165, %s166
      %p177 = scmp.eq.s32.totalorder %s35, 0
      %p178 = por %p176, %p177
      %p179 = scmp.ne.s32.totalorder %s165, %s166
      %p180 = scmp.eq.s32.totalorder %s36, 1
      %p181 = por %p179, %p180
      %p183 = scmp.ne.s32.totalorder %s166, %s182
      %p184 = scmp.eq.s32.totalorder %s36, 0
      %p185 = por %p183, %p184
      %s186 = ssub.s32 %s37, %s56
      %s187 = ssub.s32 %s38, %s52
      %s188 = sor.u32 %s186, %s187
      %p189 = scmp.eq.s32.totalorder %s188, 0
      %s191 = sadd.s32 %s190, 1
      %s192 = scalar_select %p189, %s190, %s191
      %p195 = pneg %p189
      %p196 = scmp.eq.s32.totalorder %s30, 1
      %p197 = por %p195, %p196
      %p198 = scmp.ne.s32.totalorder %s190, %s193
      %p199 = scmp.eq.s32.totalorder %s30, 0
      %p200 = por %p198, %p199
      %p201 = scmp.ne.s32.totalorder %s190, %s193
      %p202 = scmp.eq.s32.totalorder %s35, 1
      %p203 = por %p201, %p202
      %p204 = scmp.ne.s32.totalorder %s193, %s194
      %p205 = scmp.eq.s32.totalorder %s35, 0
      %p206 = por %p204, %p205
      %p207 = scmp.ne.s32.totalorder %s193, %s194
      %p208 = scmp.eq.s32.totalorder %s36, 1
      %p209 = por %p207, %p208
      %p211 = scmp.ne.s32.totalorder %s194, %s210
      %p212 = scmp.eq.s32.totalorder %s36, 0
      %p213 = por %p211, %p212
      %s214 = ssub.s32 %s37, %s56
      %s215 = ssub.s32 %s38, %s52
      %s216 = sor.u32 %s214, %s215
      %p217 = scmp.eq.s32.totalorder %s216, 0
      %s219 = sadd.s32 %s218, 1
      %s220 = scalar_select %p217, %s218, %s219
      %p223 = pneg %p217
      %p224 = scmp.eq.s32.totalorder %s30, 1
      %p225 = por %p223, %p224
      %p226 = scmp.ne.s32.totalorder %s218, %s221
      %p227 = scmp.eq.s32.totalorder %s30, 0
      %p228 = por %p226, %p227
      %p229 = scmp.ne.s32.totalorder %s218, %s221
      %p230 = scmp.eq.s32.totalorder %s35, 1
      %p231 = por %p229, %p230
      %p232 = scmp.ne.s32.totalorder %s221, %s222
      %p233 = scmp.eq.s32.totalorder %s35, 0
      %p234 = por %p232, %p233
      %p235 = scmp.ne.s32.totalorder %s221, %s222
      %p236 = scmp.eq.s32.totalorder %s36, 1
      %p237 = por %p235, %p236
      %p239 = scmp.ne.s32.totalorder %s222, %s238
      %p240 = scmp.eq.s32.totalorder %s36, 0
      %p241 = por %p239, %p240
      %s242 = ssub.s32 %s37, %s56
      %s243 = ssub.s32 %s38, %s52
      %s244 = sor.u32 %s242, %s243
      %p245 = scmp.eq.s32.totalorder %s244, 0
      %s247 = sadd.s32 %s246, 1
      %s248 = scalar_select %p245, %s246, %s247
      %p251 = pneg %p245
      %p252 = scmp.eq.s32.totalorder %s30, 1
      %p253 = por %p251, %p252
      %p254 = scmp.ne.s32.totalorder %s246, %s249
      %p255 = scmp.eq.s32.totalorder %s30, 0
      %p256 = por %p254, %p255
      %p257 = scmp.ne.s32.totalorder %s246, %s249
      %p258 = scmp.eq.s32.totalorder %s35, 1
      %p259 = por %p257, %p258
      %p260 = scmp.ne.s32.totalorder %s249, %s250
      %p261 = scmp.eq.s32.totalorder %s35, 0
      %p262 = por %p260, %p261
      %p263 = scmp.ne.s32.totalorder %s249, %s250
      %p264 = scmp.eq.s32.totalorder %s36, 1
      %p265 = por %p263, %p264
      %p267 = scmp.ne.s32.totalorder %s250, %s266
      %p268 = scmp.eq.s32.totalorder %s36, 0
      %p269 = por %p267, %p268
      %s270 = ssub.s32 %s37, %s56
      %s271 = ssub.s32 %s38, %s52
      %s272 = sor.u32 %s270, %s271
      %p273 = scmp.eq.s32.totalorder %s272, 0
      %s275 = sadd.s32 %s274, 1
      %s276 = scalar_select %p273, %s274, %s275
      %p279 = pneg %p273
      %p280 = scmp.eq.s32.totalorder %s30, 1
      %p281 = por %p279, %p280
      %p282 = scmp.ne.s32.totalorder %s274, %s277
      %p283 = scmp.eq.s32.totalorder %s30, 0
      %p284 = por %p282, %p283
      %p285 = scmp.ne.s32.totalorder %s274, %s277
      %p286 = scmp.eq.s32.totalorder %s35, 1
      %p287 = por %p285, %p286
      %p288 = scmp.ne.s32.totalorder %s277, %s278
      %p289 = scmp.eq.s32.totalorder %s35, 0
      %p290 = por %p288, %p289
      %p291 = scmp.ne.s32.totalorder %s277, %s278
      %p292 = scmp.eq.s32.totalorder %s36, 1
      %p293 = por %p291, %p292
      %p295 = scmp.ne.s32.totalorder %s278, %s294
      %p296 = scmp.eq.s32.totalorder %s36, 0
      %p297 = por %p295, %p296
      %s298 = ssub.s32 %s37, %s56
      %s299 = ssub.s32 %s38, %s52
      %s300 = sor.u32 %s298, %s299
      %p301 = scmp.eq.s32.totalorder %s300, 0
      %s303 = sadd.s32 %s302, 1
      %s304 = scalar_select %p301, %s302, %s303
      %p307 = pneg %p301
      %p308 = scmp.eq.s32.totalorder %s30, 1
      %p309 = por %p307, %p308
      %p310 = scmp.ne.s32.totalorder %s302, %s305
      %p311 = scmp.eq.s32.totalorder %s30, 0
      %p312 = por %p310, %p311
      %p313 = scmp.ne.s32.totalorder %s302, %s305
      %p314 = scmp.eq.s32.totalorder %s35, 1
      %p315 = por %p313, %p314
      %p316 = scmp.ne.s32.totalorder %s305, %s306
      %p317 = scmp.eq.s32.totalorder %s35, 0
      %p318 = por %p316, %p317
      %p319 = scmp.ne.s32.totalorder %s305, %s306
      %p320 = scmp.eq.s32.totalorder %s36, 1
      %p321 = por %p319, %p320
      %p323 = scmp.ne.s32.totalorder %s306, %s322
      %p324 = scmp.eq.s32.totalorder %s36, 0
      %p325 = por %p323, %p324
      %p326 = scmp.le.s32.totalorder 1, %s30
      %p327 = scmp.lt.s32.totalorder %s30, 3
      %p328 = pnand %p326, %p327
      %p329 = pneg %p328
      // Predicated region
      $region9: #{tpu_custom_call.1} parent=5 // pred_check
        _
      $region10: #{tpu_custom_call.1} parent=5 // pred_check_branch
        %331 = sbr.rel (%p328) target = $region12
      $region11: #{tpu_custom_call.1} parent=5 // pred_region
        %s332 = ssub.s32 %s30, 1
        // Predicated region
        $region13: #{tpu_custom_call.1} parent=11 // pred_check
          %p333 = pneg %p105
        $region14: #{tpu_custom_call.1} parent=11 // pred_check_branch
          %335 = sbr.rel (%p333) target = $region16
        $region15: #{tpu_custom_call.1} parent=11 // pred_region
          %s336 = smul.u32 4, %s42
          %s338 = ssub.s32 512, 512
          %339 = vsyncadd [#allocation8], %s338
          %s340 = smul.addr %s336, 128
          %s341 = scalar_lea.hbm %s1, %s340
          %s342 = sshll.u32 [#allocation7], 4
          %s343 = int_to_ptr.vmem [resolvable:$true] %s342
          %348 = dma.hbm_to_vmem [thread:$0]  %s341, 512, %s343, [#allocation8], 128, 128, 8
        $region16: #{tpu_custom_call.1} parent=11 // pred_fallthru
          _
        // Predicated region
        $region17: #{tpu_custom_call.1} parent=11 // pred_check
          %p349 = pneg %p126
        $region18: #{tpu_custom_call.1} parent=11 // pred_check_branch
          %351 = sbr.rel (%p349) target = $region20
        $region19: #{tpu_custom_call.1} parent=11 // pred_region
          _
        $region20: #{tpu_custom_call.1} parent=11 // pred_fallthru
          _
        // Predicated region
        $region21: #{tpu_custom_call.1} parent=11 // pred_check
          %p352 = pneg %p152
        $region22: #{tpu_custom_call.1} parent=11 // pred_check_branch
          %354 = sbr.rel (%p352) target = $region24
        $region23: #{tpu_custom_call.1} parent=11 // pred_region
          %s355 = smul.u32 2, %s41
          %s357 = ssub.s32 256, 256
          %358 = vsyncadd [#allocation8], %s357
          %s359 = smul.addr %s355, 128
          %s360 = scalar_lea.hbm %s3, %s359
          %s361 = sshll.u32 [#allocation9], 4
          %s362 = int_to_ptr.vmem [resolvable:$true] %s361
          %367 = dma.hbm_to_vmem [thread:$0]  %s360, 256, %s362, [#allocation8], 128, 128, 8
        $region24: #{tpu_custom_call.1} parent=11 // pred_fallthru
          _
        // Predicated region
        $region25: #{tpu_custom_call.1} parent=11 // pred_check
          %p368 = pneg %p178
        $region26: #{tpu_custom_call.1} parent=11 // pred_check_branch
          %370 = sbr.rel (%p368) target = $region28
        $region27: #{tpu_custom_call.1} parent=11 // pred_region
          %s371 = smul.u32 2, %s41
          %s373 = ssub.s32 256, 256
          %374 = vsyncadd [#allocation11], %s373
          %s375 = smul.addr %s371, 128
          %s376 = scalar_lea.hbm %s4, %s375
          %s377 = sshll.u32 [#allocation10], 4
          %s378 = int_to_ptr.vmem [resolvable:$true] %s377
          %383 = dma.hbm_to_vmem [thread:$0]  %s376, 256, %s378, [#allocation11], 128, 128, 8
        $region28: #{tpu_custom_call.1} parent=11 // pred_fallthru
          _
      $region12: #{tpu_custom_call.1} parent=5 // pred_fallthru
        _
      %p384 = scmp.lt.s32.totalorder %s30, 2
      // Predicated region
      $region29: #{tpu_custom_call.1} parent=5 // pred_check
        %p385 = pneg %p384
      $region30: #{tpu_custom_call.1} parent=5 // pred_check_branch
        %387 = sbr.rel (%p385) target = $region32
      $region31: #{tpu_custom_call.1} parent=5 // pred_region
        // Predicated region
        $region33: #{tpu_custom_call.1} parent=31 // pred_check
          %p388 = pneg %p73
        $region34: #{tpu_custom_call.1} parent=31 // pred_check_branch
          %390 = sbr.rel (%p388) target = $region36
        $region35: #{tpu_custom_call.1} parent=31 // pred_region
          %s391 = sand.u32 %s63, 1
          %s392 = scalar_lea.sflag [#allocation5], %s391
          %s393 = sand.u32 %s63, 1
          %s394 = smul.addr %s393, 16
          %s395 = scalar_lea.vmem [#allocation4], %s394
          %s396 = smul.u32 2, %s38
          %s398 = ssub.s32 256, 256
          %399 = vsyncadd %s392, %s398
          %s400 = sadd.s32 %s39, %s396
          %s401 = smul.addr %s37, 2
          %s402 = sadd.s32 %s400, %s401
          %s403 = smul.addr %s402, 128
          %s404 = scalar_lea.hbm %s0, %s403
          %s405 = sshll.u32 %s395, 4
          %s406 = int_to_ptr.vmem [resolvable:$true] %s405
          %411 = dma.hbm_to_vmem [thread:$0]  %s404, 256, %s406, %s392, 128, 128, 8
        $region36: #{tpu_custom_call.1} parent=31 // pred_fallthru
          _
      $region32: #{tpu_custom_call.1} parent=5 // pred_fallthru
        _
      %p412 = scmp.le.s32.totalorder 1, %s30
      %p413 = scmp.lt.s32.totalorder %s30, 3
      %p414 = pnand %p412, %p413
      %p415 = pneg %p414
      // Predicated region
      $region37: #{tpu_custom_call.1} parent=5 // pred_check
        _
      $region38: #{tpu_custom_call.1} parent=5 // pred_check_branch
        %417 = sbr.rel (%p414) target = $region40
      $region39: #{tpu_custom_call.1} parent=5 // pred_region
        %s418 = ssub.s32 %s30, 1
        %s419 = sand.u32 %s66, 1
        %s420 = scalar_lea.sflag [#allocation5], %s419
        %s421 = sand.u32 %s66, 1
        %s422 = smul.addr %s421, 16
        %s423 = scalar_lea.vmem [#allocation4], %s422
        // Predicated region
        $region41: #{tpu_custom_call.1} parent=39 // pred_check
          %p424 = pneg %p79
        $region42: #{tpu_custom_call.1} parent=39 // pred_check_branch
          %426 = sbr.rel (%p424) target = $region44
        $region43: #{tpu_custom_call.1} parent=39 // pred_region
          %427 = dma.done %s420, 256
        $region44: #{tpu_custom_call.1} parent=39 // pred_fallthru
          _
        // Predicated region
        $region45: #{tpu_custom_call.1} parent=39 // pred_check
          %p428 = pneg %p105
        $region46: #{tpu_custom_call.1} parent=39 // pred_check_branch
          %430 = sbr.rel (%p428) target = $region48
        $region47: #{tpu_custom_call.1} parent=39 // pred_region
          %431 = dma.done [#allocation8], 512
        $region48: #{tpu_custom_call.1} parent=39 // pred_fallthru
          _
        // Predicated region
        $region49: #{tpu_custom_call.1} parent=39 // pred_check
          %p432 = pneg %p152
        $region50: #{tpu_custom_call.1} parent=39 // pred_check_branch
          %434 = sbr.rel (%p432) target = $region52
        $region51: #{tpu_custom_call.1} parent=39 // pred_region
          %435 = dma.done [#allocation8], 256
        $region52: #{tpu_custom_call.1} parent=39 // pred_fallthru
          _
        // Predicated region
        $region53: #{tpu_custom_call.1} parent=39 // pred_check
          %p436 = pneg %p178
        $region54: #{tpu_custom_call.1} parent=39 // pred_check_branch
          %438 = sbr.rel (%p436) target = $region56
        $region55: #{tpu_custom_call.1} parent=39 // pred_region
          %439 = dma.done [#allocation11], 256
        $region56: #{tpu_custom_call.1} parent=39 // pred_fallthru
          _
        %s440 = sand.u32 %s66, 1
        %s441 = scalar_lea.sflag [#allocation5], %s440
        %s442 = sand.u32 %s66, 1
        %s443 = smul.addr %s442, 16
        %s444 = scalar_lea.vmem [#allocation4], %s443
        %p445 = pneg %p79
        %p446 = pneg %p76
        %p447 = pneg %p105
        %p448 = pneg %p102
        %p449 = pneg %p126
        %p450 = pneg %p123
        %p451 = pneg %p152
        %p452 = pneg %p149
        %p453 = pneg %p178
        %p454 = pneg %p175
        %p455 = pneg %p206
        %p456 = pneg %p203
        %s457 = sand.u32 %s193, 1
        %s458 = scalar_lea.sflag [#allocation6], %s457
        %s459 = sand.u32 %s193, 1
        %s460 = smul.addr %s459, 16
        %s461 = scalar_lea.vmem [#allocation12], %s460
        %p462 = pneg %p234
        %p463 = pneg %p231
        %s464 = sand.u32 %s35, 1
        %s465 = scalar_lea.sflag [#allocation14], %s464
        %s466 = sand.u32 %s221, 1
        %s467 = smul.addr %s466, 16
        %s468 = scalar_lea.vmem [#allocation13], %s467
        %p469 = pneg %p262
        %p470 = pneg %p259
        %s471 = sand.u32 %s35, 1
        %s472 = scalar_lea.sflag [#allocation14], %s471
        %s473 = sand.u32 %s249, 1
        %s474 = smul.addr %s473, 16
        %s475 = scalar_lea.vmem [#allocation15], %s474
        %p476 = pneg %p290
        %p477 = pneg %p287
        %s478 = sand.u32 %s35, 1
        %s479 = scalar_lea.sflag [#allocation17], %s478
        %s480 = sand.u32 %s277, 1
        %s481 = smul.addr %s480, 16
        %s482 = scalar_lea.vmem [#allocation16], %s481
        %p483 = pneg %p318
        %p484 = pneg %p315
        %s485 = sand.u32 %s35, 1
        %s486 = scalar_lea.sflag [#allocation17], %s485
        %s487 = sand.u32 %s305, 1
        %s488 = smul.addr %s487, 16
        %s489 = scalar_lea.vmem [#allocation18], %s488
        %s490 = smul.u32 2, %s41
        %s491 = smul.u32 4, %s42
        %s492 = smul.u32 2, %s41
        %s493 = smul.u32 2, %s41
        %s494 = smul.u32 2, %s41
        %s495 = smul.u32 2, %s41
        %s496 = smul.u32 2, %s41
        %s497 = smul.u32 2, %s41
        %s498 = smul.u32 2, %s41
        %p499 = scmp.eq.s32.totalorder %s42, 0
        // Predicated region
        $region57: #{tpu_custom_call.1} parent=39 // pred_check
          %p500 = pneg %p499
        $region58: #{tpu_custom_call.1} parent=39 // pred_check_branch
          %502 = sbr.rel (%p500) target = $region60
        $region59: #{tpu_custom_call.1} parent=39 // pred_region
          %vm503 = vcmask 785408
          %504 = vst.msk [vmem:[#allocation2] sm:$0xff] %vm503, 0.0
          %505 = vst.msk [vmem:[#allocation2 + $0x8] sm:$0xff] %vm503, 0.0
          %vm506 = vcmask 7168
          %507 = vst.msk [vmem:[#allocation3] sm:$0xff] %vm506, 0.0
          %508 = vst.msk [vmem:[#allocation3 + $0x8] sm:$0xff] %vm506, 0.0
        $region60: #{tpu_custom_call.1} parent=39 // pred_fallthru
          _
        %v509 = vld [vmem:[%s423] sm:$0xff]
        %v510 = vld [vmem:[%s423 + $0x8] sm:$0xff]
        %v511 = vld [vmem:[#allocation3] sm:$0xff]
        %v512 = vld [vmem:[#allocation3 + $0x8] sm:$0xff]
        %v513 = vmul.f32 %v509, %v509
        %v514 = vmul.f32 %v510, %v510
        %vm515 = vcmask 261120
        %v516 = vsel %vm515, %v513, 0.0
        %517 = vadd.xlane.f32.xlu0 %v516
        %v518 = vpop.xlane.xlu0 %517
        %v519 = vsel %vm515, %v514, 0.0
        %520 = vadd.xlane.f32.xlu0 %v519
        %v521 = vpop.xlane.xlu0 %520
        %v522 = vadd.f32 %v511, %v518
        %v523 = vadd.f32 %v512, %v521
        %vm524 = vcmask 7168
        %525 = vst.msk [vmem:[#allocation3] sm:$0xff] %vm524, %v522
        %526 = vst.msk [vmem:[#allocation3 + $0x8] sm:$0xff] %vm524, %v523
        %v527 = vld [vmem:[#allocation2] sm:$0xff]
        %v528 = vld [vmem:[#allocation2 + $0x8] sm:$0xff]
        %v529 = vld [vmem:[#allocation7] sm:$0xff]
        %v530 = vld [vmem:[#allocation7 + $0x8] sm:$0xff]
        %v531 = vld [vmem:[#allocation7 + $0x10] sm:$0xff]
        %v532 = vld [vmem:[#allocation7 + $0x18] sm:$0xff]
        %v534 = vsel %vm515, %v509, 0
        %v537 = vsel %vm515, %v510, 0
        %539 = vmatprep.subr.mxu0 0.0
        %540 = vmatpush1.msra.mxu0 0.0
        %541 = vmatprep.subr.mxu0 0.0
        %542 = vmatpush1.msra.mxu0 0.0
        %543 = vmatprep.subr.mxu0 0.0
        %544 = vmatpush1.msra.mxu0 0.0
        %545 = vmatprep.subr.mxu0 0.0
        %546 = vmatpush1.msra.mxu0 0.0
        %547 = vmatprep.subr.mxu0 0.0
        %548 = vmatpush1.msra.mxu0 0.0
        %549 = vmatprep.subr.mxu0 0.0
        %550 = vmatpush1.msra.mxu0 0.0
        %551 = vmatprep.subr.mxu0 0.0
        %552 = vmatpush1.msra.mxu0 0.0
        %553 = vmatprep.subr.mxu0 0.0
        %554 = vmatpush1.msra.mxu0 0.0
        %555 = vmatprep.subr.mxu0 0.0
        %556 = vmatpush1.msra.mxu0 0.0
        %557 = vmatprep.subr.mxu0 0.0
        %558 = vmatpush1.msra.mxu0 0.0
        %559 = vmatprep.subr.mxu0 0.0
        %560 = vmatpush1.msra.mxu0 0.0
        %561 = vmatprep.subr.mxu0 0.0
        %562 = vmatpush1.msra.mxu0 0.0
        %563 = vmatprep.subr.mxu0 0.0
        %564 = vmatpush1.msra.mxu0 %v532
        %565 = vmatprep.subr.mxu0 0.0
        %566 = vmatpush1.msra.mxu0 %v531
        %567 = vmatprep.subr.mxu0 0.0
        %568 = vmatpush1.msra.mxu0 %v530
        %569 = vmatprep.subr.mxu0 0.0
        %570 = vmatpush1.msra.mxu0 %v529
        %571 = vmatprep.subr.mxu0 0.0
        %572 = vmatpush2.msra.mxu0 0.0
        %573 = vmatprep.subr.mxu0 0.0
        %574 = vmatpush2.msra.mxu0 0.0
        %575 = vmatprep.subr.mxu0 0.0
        %576 = vmatpush2.msra.mxu0 0.0
        %577 = vmatprep.subr.mxu0 0.0
        %578 = vmatpush2.msra.mxu0 0.0
        %579 = vmatprep.subr.mxu0 0.0
        %580 = vmatpush2.msra.mxu0 0.0
        %581 = vmatprep.subr.mxu0 0.0
        %582 = vmatpush2.msra.mxu0 0.0
        %583 = vmatprep.subr.mxu0 0.0
        %584 = vmatpush2.msra.mxu0 0.0
        %585 = vmatprep.subr.mxu0 0.0
        %586 = vmatpush2.msra.mxu0 0.0
        %587 = vmatprep.subr.mxu0 0.0
        %588 = vmatpush2.msra.mxu0 0.0
        %589 = vmatprep.subr.mxu0 0.0
        %590 = vmatpush2.msra.mxu0 0.0
        %591 = vmatprep.subr.mxu0 0.0
        %592 = vmatpush2.msra.mxu0 0.0
        %593 = vmatprep.subr.mxu0 0.0
        %594 = vmatpush2.msra.mxu0 0.0
        %595 = vmatprep.subr.mxu0 0.0
        %596 = vmatpush2.msra.mxu0 0.0
        %597 = vmatprep.subr.mxu0 0.0
        %598 = vmatpush2.msra.mxu0 0.0
        %599 = vmatprep.subr.mxu0 0.0
        %600 = vmatpush2.msra.mxu0 0.0
        %601 = vmatprep.subr.mxu0 0.0
        %602 = vmatpush2.msra.mxu0 0.0
        %603 = vmatprep.mubr.f32.mxu0 0.0
        %604 = vmatmul.mubr.f32.gmra.mxu0 %v534
        %v605 = vpop.f32.mrf.mxu0
        %v606 = vadd.f32 0.0, %v605
        %v607 = vpop.f32.mrf.mxu0
        %608 = vmatprep.mubr.f32.mxu0 0.0
        %609 = vmatmul.mubr.f32.gmra.mxu0 %v537
        %v610 = vpop.f32.mrf.mxu0
        %v611 = vadd.f32 0.0, %v610
        %v612 = vpop.f32.mrf.mxu0
        %613 = vdwg.mxu0
        %v614 = vadd.f32 %v527, %v606
        %v615 = vadd.f32 %v528, %v611
        %vm616 = vcmask 785408
        %617 = vst.msk [vmem:[#allocation2] sm:$0xff] %vm616, %v614
        %618 = vst.msk [vmem:[#allocation2 + $0x8] sm:$0xff] %vm616, %v615
        // Predicated region
        $region61: #{tpu_custom_call.1} parent=39 // pred_check
          %p619 = pneg %p499
        $region62: #{tpu_custom_call.1} parent=39 // pred_check_branch
          %621 = sbr.rel (%p619) target = $region64
        $region63: #{tpu_custom_call.1} parent=39 // pred_region
          %v622 = vld [vmem:[#allocation3] sm:$0xff]
          %v623 = vld [vmem:[#allocation3 + $0x8] sm:$0xff]
          %v624 = vrcp.pop 32.0
          %v625 = vmul.f32 %v622, %v624
          %v626 = vmul.f32 %v623, %v624
          %v627 = vadd.f32 %v625, 1e-05
          %v628 = vadd.f32 %v626, 1e-05
          %v629 = vrsqrt.pop %v627
          %v630 = vrsqrt.pop %v628
          %v631 = vld [vmem:[#allocation2] sm:$0xff]
          %v632 = vld [vmem:[#allocation2 + $0x8] sm:$0xff]
          %634 = vset.pattern.permute.xlu0 0
          %635 = vperm.xlu0 %634, %v629
          %v636 = vpop.permute.xlu0 %635
          %639 = vset.pattern.permute.xlu0 0
          %640 = vperm.xlu0 %639, %v630
          %v641 = vpop.permute.xlu0 %640
          %v643 = vmul.f32 %v631, %v636
          %v644 = vmul.f32 %v632, %v641
          %v645 = vld [vmem:[%s2] sm:$0x1]
          %v647 = vlaneseq
          %v648 = vshrl.u32 %v647, 7
          %v649 = vsub.s32 0, %v648
          %v650 = vrot.slane %v645, %v649
          %v652 = vadd.f32 %v643, %v650
          %v653 = vadd.f32 %v644, %v650
          %v654 = vld [vmem:[#allocation9] sm:$0xff]
          %v655 = vld [vmem:[#allocation9 + $0x8] sm:$0xff]
          %v656 = vld [vmem:[#allocation10] sm:$0xff]
          %v657 = vld [vmem:[#allocation10 + $0x8] sm:$0xff]
          %v658 = vmul.f32 %v652, %v654
          %v659 = vmul.f32 %v653, %v655
          %662 = vrot.lane.b32.xlu0 %v656, 16
          %v663 = vpop.permute.xlu0 %662
          %664 = vrot.lane.b32.xlu0 %v657, 16
          %v665 = vpop.permute.xlu0 %664
          %v668 = vmul.f32 %v652, %v663
          %v669 = vmul.f32 %v653, %v665
          %672 = vrot.lane.b32.xlu0 %v668, 112
          %v673 = vpop.permute.xlu0 %672
          %674 = vrot.lane.b32.xlu0 %v669, 112
          %v675 = vpop.permute.xlu0 %674
          %v678 = vsub.f32 %v658, %v673
          %v679 = vsub.f32 %v659, %v675
          %vm680 = vcmask 130048
          %681 = vst.msk [vmem:[%s461] sm:$0xff] %vm680, %v678
          %682 = vst.msk [vmem:[%s461 + $0x8] sm:$0xff] %vm680, %v679
          %v683 = vmul.f32 %v652, %v656
          %v684 = vmul.f32 %v653, %v657
          %687 = vrot.lane.b32.xlu0 %v654, 16
          %v688 = vpop.permute.xlu0 %687
          %689 = vrot.lane.b32.xlu0 %v655, 16
          %v690 = vpop.permute.xlu0 %689
          %v693 = vmul.f32 %v652, %v688
          %v694 = vmul.f32 %v653, %v690
          %697 = vrot.lane.b32.xlu0 %v693, 112
          %v698 = vpop.permute.xlu0 %697
          %699 = vrot.lane.b32.xlu0 %v694, 112
          %v700 = vpop.permute.xlu0 %699
          %v703 = vadd.f32 %v683, %v698
          %v704 = vadd.f32 %v684, %v700
          %705 = vst.msk [vmem:[%s468] sm:$0xff] %vm680, %v703
          %706 = vst.msk [vmem:[%s468 + $0x8] sm:$0xff] %vm680, %v704
          %707 = vrot.lane.b32.xlu0 %v654, 32
          %v708 = vpop.permute.xlu0 %707
          %709 = vrot.lane.b32.xlu0 %v655, 32
          %v710 = vpop.permute.xlu0 %709
          %v713 = vmul.f32 %v652, %v708
          %v714 = vmul.f32 %v653, %v710
          %715 = vrot.lane.b32.xlu0 %v656, 48
          %v716 = vpop.permute.xlu0 %715
          %717 = vrot.lane.b32.xlu0 %v657, 48
          %v718 = vpop.permute.xlu0 %717
          %v721 = vmul.f32 %v652, %v716
          %v722 = vmul.f32 %v653, %v718
          %725 = vrot.lane.b32.xlu0 %v721, 112
          %v726 = vpop.permute.xlu0 %725
          %727 = vrot.lane.b32.xlu0 %v722, 112
          %v728 = vpop.permute.xlu0 %727
          %v731 = vsub.f32 %v713, %v726
          %v732 = vsub.f32 %v714, %v728
          %735 = vrot.lane.b32.xlu0 %v731, 96
          %v736 = vpop.permute.xlu0 %735
          %737 = vrot.lane.b32.xlu0 %v732, 96
          %v738 = vpop.permute.xlu0 %737
          %741 = vst.msk [vmem:[%s475] sm:$0xff] %vm680, %v736
          %742 = vst.msk [vmem:[%s475 + $0x8] sm:$0xff] %vm680, %v738
          %743 = vrot.lane.b32.xlu0 %v656, 32
          %v744 = vpop.permute.xlu0 %743
          %745 = vrot.lane.b32.xlu0 %v657, 32
          %v746 = vpop.permute.xlu0 %745
          %v749 = vmul.f32 %v652, %v744
          %v750 = vmul.f32 %v653, %v746
          %751 = vrot.lane.b32.xlu0 %v654, 48
          %v752 = vpop.permute.xlu0 %751
          %753 = vrot.lane.b32.xlu0 %v655, 48
          %v754 = vpop.permute.xlu0 %753
          %v757 = vmul.f32 %v652, %v752
          %v758 = vmul.f32 %v653, %v754
          %761 = vrot.lane.b32.xlu0 %v757, 112
          %v762 = vpop.permute.xlu0 %761
          %763 = vrot.lane.b32.xlu0 %v758, 112
          %v764 = vpop.permute.xlu0 %763
          %v767 = vadd.f32 %v749, %v762
          %v768 = vadd.f32 %v750, %v764
          %771 = vrot.lane.b32.xlu0 %v767, 96
          %v772 = vpop.permute.xlu0 %771
          %773 = vrot.lane.b32.xlu0 %v768, 96
          %v774 = vpop.permute.xlu0 %773
          %777 = vst.msk [vmem:[%s482] sm:$0xff] %vm680, %v772
          %778 = vst.msk [vmem:[%s482 + $0x8] sm:$0xff] %vm680, %v774
          %781 = vrot.lane.b32.xlu0 %v652, 64
          %v782 = vpop.permute.xlu0 %781
          %783 = vrot.lane.b32.xlu0 %v653, 64
          %v784 = vpop.permute.xlu0 %783
          %787 = vst.msk [vmem:[%s489] sm:$0xff] %vm515, %v782
          %788 = vst.msk [vmem:[%s489 + $0x8] sm:$0xff] %vm515, %v784
        $region64: #{tpu_custom_call.1} parent=39 // pred_fallthru
          _
        %s789 = sand.u32 %s193, 1
        %s790 = scalar_lea.sflag [#allocation6], %s789
        %s791 = sand.u32 %s193, 1
        %s792 = smul.addr %s791, 16
        %s793 = scalar_lea.vmem [#allocation12], %s792
        %s794 = sand.u32 %s35, 1
        %s795 = scalar_lea.sflag [#allocation14], %s794
        %s796 = sand.u32 %s221, 1
        %s797 = smul.addr %s796, 16
        %s798 = scalar_lea.vmem [#allocation13], %s797
        %s799 = sand.u32 %s35, 1
        %s800 = scalar_lea.sflag [#allocation14], %s799
        %s801 = sand.u32 %s249, 1
        %s802 = smul.addr %s801, 16
        %s803 = scalar_lea.vmem [#allocation15], %s802
        %s804 = sand.u32 %s35, 1
        %s805 = scalar_lea.sflag [#allocation17], %s804
        %s806 = sand.u32 %s277, 1
        %s807 = smul.addr %s806, 16
        %s808 = scalar_lea.vmem [#allocation16], %s807
        %s809 = sand.u32 %s35, 1
        %s810 = scalar_lea.sflag [#allocation17], %s809
        %s811 = sand.u32 %s305, 1
        %s812 = smul.addr %s811, 16
        %s813 = scalar_lea.vmem [#allocation18], %s812
        // Predicated region
        $region65: #{tpu_custom_call.1} parent=39 // pred_check
          %p814 = pneg %p203
        $region66: #{tpu_custom_call.1} parent=39 // pred_check_branch
          %816 = sbr.rel (%p814) target = $region68
        $region67: #{tpu_custom_call.1} parent=39 // pred_region
          %s817 = smul.u32 2, %s41
          %s819 = ssub.s32 256, 256
          %820 = vsyncadd %s790, %s819
          %s821 = smul.addr %s40, 2
          %s822 = sadd.s32 %s817, %s821
          %s823 = smul.addr %s822, 128
          %s824 = scalar_lea.hbm %s5, %s823
          %s825 = sshll.u32 %s793, 4
          %s826 = int_to_ptr.vmem [resolvable:$true] %s825
          %831 = dma.vmem_to_hbm [thread:$0]  %s826, 256, %s824, %s790, 128, 128, 8
        $region68: #{tpu_custom_call.1} parent=39 // pred_fallthru
          _
        // Predicated region
        $region69: #{tpu_custom_call.1} parent=39 // pred_check
          %p832 = pneg %p231
        $region70: #{tpu_custom_call.1} parent=39 // pred_check_branch
          %834 = sbr.rel (%p832) target = $region72
        $region71: #{tpu_custom_call.1} parent=39 // pred_region
          %s835 = smul.u32 2, %s41
          %s837 = ssub.s32 256, 256
          %838 = vsyncadd %s795, %s837
          %s839 = smul.addr %s40, 2
          %s840 = sadd.s32 %s835, %s839
          %s841 = smul.addr %s840, 128
          %s842 = scalar_lea.hbm %s6, %s841
          %s843 = sshll.u32 %s798, 4
          %s844 = int_to_ptr.vmem [resolvable:$true] %s843
          %849 = dma.vmem_to_hbm [thread:$0]  %s844, 256, %s842, %s795, 128, 128, 8
        $region72: #{tpu_custom_call.1} parent=39 // pred_fallthru
          _
        // Predicated region
        $region73: #{tpu_custom_call.1} parent=39 // pred_check
          %p850 = pneg %p259
        $region74: #{tpu_custom_call.1} parent=39 // pred_check_branch
          %852 = sbr.rel (%p850) target = $region76
        $region75: #{tpu_custom_call.1} parent=39 // pred_region
          %s853 = smul.u32 2, %s41
          %s855 = ssub.s32 256, 256
          %856 = vsyncadd %s800, %s855
          %s857 = smul.addr %s40, 2
          %s858 = sadd.s32 %s853, %s857
          %s859 = smul.addr %s858, 128
          %s860 = scalar_lea.hbm %s7, %s859
          %s861 = sshll.u32 %s803, 4
          %s862 = int_to_ptr.vmem [resolvable:$true] %s861
          %867 = dma.vmem_to_hbm [thread:$0]  %s862, 256, %s860, %s800, 128, 128, 8
        $region76: #{tpu_custom_call.1} parent=39 // pred_fallthru
          _
        // Predicated region
        $region77: #{tpu_custom_call.1} parent=39 // pred_check
          %p868 = pneg %p287
        $region78: #{tpu_custom_call.1} parent=39 // pred_check_branch
          %870 = sbr.rel (%p868) target = $region80
        $region79: #{tpu_custom_call.1} parent=39 // pred_region
          %s871 = smul.u32 2, %s41
          %s873 = ssub.s32 256, 256
          %874 = vsyncadd %s805, %s873
          %s875 = smul.addr %s40, 2
          %s876 = sadd.s32 %s871, %s875
          %s877 = smul.addr %s876, 128
          %s878 = scalar_lea.hbm %s8, %s877
          %s879 = sshll.u32 %s808, 4
          %s880 = int_to_ptr.vmem [resolvable:$true] %s879
          %885 = dma.vmem_to_hbm [thread:$0]  %s880, 256, %s878, %s805, 128, 128, 8
        $region80: #{tpu_custom_call.1} parent=39 // pred_fallthru
          _
        // Predicated region
        $region81: #{tpu_custom_call.1} parent=39 // pred_check
          %p886 = pneg %p315
        $region82: #{tpu_custom_call.1} parent=39 // pred_check_branch
          %888 = sbr.rel (%p886) target = $region84
        $region83: #{tpu_custom_call.1} parent=39 // pred_region
          %s889 = smul.u32 2, %s41
          %s891 = ssub.s32 256, 256
          %892 = vsyncadd %s810, %s891
          %s893 = smul.addr %s40, 2
          %s894 = sadd.s32 %s889, %s893
          %s895 = smul.addr %s894, 128
          %s896 = scalar_lea.hbm %s9, %s895
          %s897 = sshll.u32 %s813, 4
          %s898 = int_to_ptr.vmem [resolvable:$true] %s897
          %903 = dma.vmem_to_hbm [thread:$0]  %s898, 256, %s896, %s810, 128, 128, 8
        $region84: #{tpu_custom_call.1} parent=39 // pred_fallthru
          _
      $region40: #{tpu_custom_call.1} parent=5 // pred_fallthru
        _
      %p904 = scmp.le.s32.totalorder 2, %s30
      // Predicated region
      $region85: #{tpu_custom_call.1} parent=5 // pred_check
        %p905 = pneg %p904
      $region86: #{tpu_custom_call.1} parent=5 // pred_check_branch
        %907 = sbr.rel (%p905) target = $region88
      $region87: #{tpu_custom_call.1} parent=5 // pred_region
        %s908 = ssub.s32 %s30, 2
        // Predicated region
        $region89: #{tpu_custom_call.1} parent=87 // pred_check
          %p909 = pneg %p209
        $region90: #{tpu_custom_call.1} parent=87 // pred_check_branch
          %911 = sbr.rel (%p909) target = $region92
        $region91: #{tpu_custom_call.1} parent=87 // pred_region
          %s912 = sand.u32 %s194, 1
          %s913 = scalar_lea.sflag [#allocation6], %s912
          %s914 = sand.u32 %s194, 1
          %s915 = smul.addr %s914, 16
          %s916 = scalar_lea.vmem [#allocation12], %s915
          %917 = dma.done %s913, 256
        $region92: #{tpu_custom_call.1} parent=87 // pred_fallthru
          _
        // Predicated region
        $region93: #{tpu_custom_call.1} parent=87 // pred_check
          %p918 = pneg %p237
        $region94: #{tpu_custom_call.1} parent=87 // pred_check_branch
          %920 = sbr.rel (%p918) target = $region96
        $region95: #{tpu_custom_call.1} parent=87 // pred_region
          %s921 = sand.u32 %s36, 1
          %s922 = scalar_lea.sflag [#allocation14], %s921
          %s923 = sand.u32 %s222, 1
          %s924 = smul.addr %s923, 16
          %s925 = scalar_lea.vmem [#allocation13], %s924
          %926 = dma.done %s922, 256
        $region96: #{tpu_custom_call.1} parent=87 // pred_fallthru
          _
        // Predicated region
        $region97: #{tpu_custom_call.1} parent=87 // pred_check
          %p927 = pneg %p265
        $region98: #{tpu_custom_call.1} parent=87 // pred_check_branch
          %929 = sbr.rel (%p927) target = $region100
        $region99: #{tpu_custom_call.1} parent=87 // pred_region
          %s930 = sand.u32 %s36, 1
          %s931 = scalar_lea.sflag [#allocation14], %s930
          %s932 = sand.u32 %s250, 1
          %s933 = smul.addr %s932, 16
          %s934 = scalar_lea.vmem [#allocation15], %s933
          %935 = dma.done %s931, 256
        $region100: #{tpu_custom_call.1} parent=87 // pred_fallthru
          _
        // Predicated region
        $region101: #{tpu_custom_call.1} parent=87 // pred_check
          %p936 = pneg %p293
        $region102: #{tpu_custom_call.1} parent=87 // pred_check_branch
          %938 = sbr.rel (%p936) target = $region104
        $region103: #{tpu_custom_call.1} parent=87 // pred_region
          %s939 = sand.u32 %s36, 1
          %s940 = scalar_lea.sflag [#allocation17], %s939
          %s941 = sand.u32 %s278, 1
          %s942 = smul.addr %s941, 16
          %s943 = scalar_lea.vmem [#allocation16], %s942
          %944 = dma.done %s940, 256
        $region104: #{tpu_custom_call.1} parent=87 // pred_fallthru
          _
        // Predicated region
        $region105: #{tpu_custom_call.1} parent=87 // pred_check
          %p945 = pneg %p321
        $region106: #{tpu_custom_call.1} parent=87 // pred_check_branch
          %947 = sbr.rel (%p945) target = $region108
        $region107: #{tpu_custom_call.1} parent=87 // pred_region
          %s948 = sand.u32 %s36, 1
          %s949 = scalar_lea.sflag [#allocation17], %s948
          %s950 = sand.u32 %s306, 1
          %s951 = smul.addr %s950, 16
          %s952 = scalar_lea.vmem [#allocation18], %s951
          %953 = dma.done %s949, 256
        $region108: #{tpu_custom_call.1} parent=87 // pred_fallthru
          _
      $region88: #{tpu_custom_call.1} parent=5 // pred_fallthru
        _
    $region6: #{tpu_custom_call.1} parent=1 // loop_footer
      %s34 = sadd.s32 1, %s30
    $region7: #{tpu_custom_call.1} parent=1 // loop_footer_branch
      %29 = sbr.rel target = $region3
    $region8: #{tpu_custom_call.1} parent=1 // loop_exit
      _
    %954 = vsyncpa [#allocation5], 1
    %s955 = scalar_lea.sflag [#allocation5], 1
    %956 = vsyncpa %s955, 1
    %957 = vsyncpa [#allocation8], 1
    %958 = vsyncpa [#allocation11], 1
    %959 = vsyncpa [#allocation6], 1
    %s960 = scalar_lea.sflag [#allocation6], 1
    %961 = vsyncpa %s960, 1
    %962 = vsyncpa [#allocation14], 1
    %s963 = scalar_lea.sflag [#allocation14], 1
    %964 = vsyncpa %s963, 1
    %965 = vsyncpa [#allocation17], 1
    %s966 = scalar_lea.sflag [#allocation17], 1
    %967 = vsyncpa %s966, 1

</llo_original>
